<compile_context>
chip_gen: v6e
topology: v6e:2x2x1
jax: 0.10.0
libtpu: 0.0.40
codegen_flags: <defaults>
</compile_context>

<pallas_src>
import jax
import jax.numpy as jnp
from jax.experimental import pallas as pl
from jax.experimental.pallas import tpu as pltpu


def _round_up(n, m):
    return ((n + m - 1) // m) * m


def _fused_mlp_kernel(x_ref, w1_ref, b1_ref, w2_ref, b2_ref, o_ref):
    """Fused y = relu(x @ W1 + b1) @ W2 + b2 — hidden stays in vregs."""
    h = jnp.dot(x_ref[...], w1_ref[...], preferred_element_type=jnp.float32)
    h = jnp.maximum(h + b1_ref[...].astype(jnp.float32), 0.0)
    y = jnp.dot(h.astype(w2_ref.dtype), w2_ref[...],
                preferred_element_type=jnp.float32)
    y = y + b2_ref[...].astype(jnp.float32)
    o_ref[...] = y.astype(o_ref.dtype)


def fused_mlp(x, w1, b1, w2, b2, *, block_b=512):
    """x: [B, d_in], w1: [d_in, d_hid], b1: [1, d_hid], w2: [d_hid, d_out],
    b2: [1, d_out] -> [B, d_out].  All feature dims at logical width."""
    B, d_in = x.shape
    d_out = w2.shape[1]

    # Batch tile: big enough to amortize per-step overhead, clamped so tiny
    # batches don't allocate an oversized block.
    bm = min(block_b, _round_up(B, 8))
    grid = (pl.cdiv(B, bm),)  # partial last block is masked by Pallas

    return pl.pallas_call(
        _fused_mlp_kernel,
        out_shape=jax.ShapeDtypeStruct((B, d_out), x.dtype),
        grid=grid,
        in_specs=[
            pl.BlockSpec((bm, d_in), lambda i: (i, 0)),     # x: tiled on batch
            pl.BlockSpec(w1.shape, lambda i: (0, 0)),        # weights resident
            pl.BlockSpec(b1.shape, lambda i: (0, 0)),
            pl.BlockSpec(w2.shape, lambda i: (0, 0)),
            pl.BlockSpec(b2.shape, lambda i: (0, 0)),
        ],
        out_specs=pl.BlockSpec((bm, d_out), lambda i: (i, 0)),
        compiler_params=pltpu.CompilerParams(
            dimension_semantics=("parallel",)),              # megacore sharding
    )(x, w1, b1, w2, b2)


class PallasSequential:
    """Mirror of the PyTorch Sequential container: applies layers in order."""

    def __init__(self, layers):
        self.layers = list(layers)

    def __call__(self, x):
        for layer in self.layers:
            x = layer(x)
        return x


class FusedLinearReluLinear:
    """Linear -> ReLU -> Linear fused into a single Pallas kernel.

    Weights use PyTorch nn.Linear init (uniform(-1/sqrt(in), 1/sqrt(in)),
    stored [out, in] then pre-transposed to [in, out]).  No padding — all
    dims stay at their logical widths.  `dtype=jnp.bfloat16` halves DMA bytes
    on v6e/v7x; accumulation stays f32 inside the kernel.
    """

    def __init__(self, key, d_in, d_hidden, d_out, dtype=jnp.float32):
        k1w, k1b, k2w, k2b = jax.random.split(key, 4)
        self.d_in, self.d_hidden, self.d_out = d_in, d_hidden, d_out
        self.dtype = dtype

        def init_linear(kw, kb, din, dout):
            bound = 1.0 / (din ** 0.5)
            w = jax.random.uniform(kw, (dout, din), jnp.float32, -bound, bound).T
            b = jax.random.uniform(kb, (1, dout), jnp.float32, -bound, bound)
            return w.astype(dtype), b.astype(dtype)

        self.w1, self.b1 = init_linear(k1w, k1b, d_in, d_hidden)
        self.w2, self.b2 = init_linear(k2w, k2b, d_hidden, d_out)

    def __call__(self, x):
        assert x.shape[-1] == self.d_in
        if x.dtype != self.dtype:
            x = x.astype(self.dtype)
        return fused_mlp(x, self.w1, self.b1, self.w2, self.b2)


if __name__ == "__main__":
    key = jax.random.PRNGKey(0)
    k_in, k_mlp = jax.random.split(key, 2)

    batch, d_in, d_hidden, d_out = 8, 32, 64, 32

    # Sequential([Linear(32,64), ReLU(), Linear(64,32)]) — the full chain is
    # one fused Pallas layer inside the Sequential container.
    model = PallasSequential([FusedLinearReluLinear(k_mlp, d_in, d_hidden, d_out)])

    # Jit the WHOLE forward (single dispatch, intermediates stay on device).
    forward = jax.jit(model.__call__)

    x = jax.random.normal(k_in, (batch, d_in), jnp.float32)
    y = forward(x)
    jax.block_until_ready(y)

    assert y.shape == (batch, d_out)
    assert y.dtype == jnp.float32

    # Reference check against plain jnp on the same (unpadded) parameters.
    lyr = model.layers[0]
    y_ref = jnp.maximum(x @ lyr.w1 + lyr.b1, 0.0) @ lyr.w2 + lyr.b2
    assert bool(jnp.allclose(y, y_ref, atol=1e-5, rtol=1e-5)), "mismatch vs reference"

    print("KERNEL_OK")
</pallas_src>

<mosaic_0001>
module attributes {stable_mosaic.version = 11 : i64} {
  func.func @_fused_mlp_kernel(%arg0: i32, %arg1: memref<8x32xf32, #tpu.memory_space<vmem>>, %arg2: memref<32x64xf32, #tpu.memory_space<vmem>>, %arg3: memref<1x64xf32, #tpu.memory_space<vmem>>, %arg4: memref<64x32xf32, #tpu.memory_space<vmem>>, %arg5: memref<1x32xf32, #tpu.memory_space<vmem>>, %arg6: memref<8x32xf32, #tpu.memory_space<vmem>>) attributes {dimension_semantics = [#tpu.dimension_semantics<parallel>], iteration_bounds = array<i64: 1>, scalar_prefetch = 0 : i64, scratch_operands = 0 : i64, tpu.core_type = #tpu.core_type<tc>, window_params = [{transform_indices = @transform_0, window_bounds = array<i64: 8, 32>}, {pipeline_mode = #tpu.pipeline_mode<synchronous>, transform_indices = @transform_1, window_bounds = array<i64: 32, 64>}, {pipeline_mode = #tpu.pipeline_mode<synchronous>, transform_indices = @transform_2, window_bounds = array<i64: 1, 64>}, {pipeline_mode = #tpu.pipeline_mode<synchronous>, transform_indices = @transform_3, window_bounds = array<i64: 64, 32>}, {pipeline_mode = #tpu.pipeline_mode<synchronous>, transform_indices = @transform_4, window_bounds = array<i64: 1, 32>}, {transform_indices = @transform_5, window_bounds = array<i64: 8, 32>}]} {
    %c0 = arith.constant 0 : index
    %c0_0 = arith.constant 0 : index
    %0 = vector.load %arg1[%c0, %c0_0] : memref<8x32xf32, #tpu.memory_space<vmem>>, vector<8x32xf32>
    %c0_1 = arith.constant 0 : index
    %c0_2 = arith.constant 0 : index
    %1 = vector.load %arg2[%c0_1, %c0_2] : memref<32x64xf32, #tpu.memory_space<vmem>>, vector<32x64xf32>
    %cst = arith.constant dense<0.000000e+00> : vector<8x64xf32>
    %2 = tpu.matmul %0, %1, %cst {dimension_numbers = #tpu.dot_dimension_numbers<[1], [0], [0], [1], [0, 0, 1, 1], [], []>} : vector<8x32xf32>, vector<32x64xf32>, vector<8x64xf32> -> vector<8x64xf32>
    %c0_3 = arith.constant 0 : index
    %c0_4 = arith.constant 0 : index
    %3 = vector.load %arg3[%c0_3, %c0_4] : memref<1x64xf32, #tpu.memory_space<vmem>>, vector<1x64xf32>
    %4 = vector.broadcast %3 : vector<1x64xf32> to vector<8x64xf32>
    %5 = arith.addf %2, %4 : vector<8x64xf32>
    %cst_5 = arith.constant 0.000000e+00 : f32
    %6 = vector.broadcast %cst_5 : f32 to vector<8x64xf32>
    %7 = arith.maximumf %5, %6 : vector<8x64xf32>
    %c0_6 = arith.constant 0 : index
    %c0_7 = arith.constant 0 : index
    %8 = vector.load %arg4[%c0_6, %c0_7] : memref<64x32xf32, #tpu.memory_space<vmem>>, vector<64x32xf32>
    %cst_8 = arith.constant dense<0.000000e+00> : vector<8x32xf32>
    %9 = tpu.matmul %7, %8, %cst_8 {dimension_numbers = #tpu.dot_dimension_numbers<[1], [0], [0], [1], [0, 0, 1, 1], [], []>} : vector<8x64xf32>, vector<64x32xf32>, vector<8x32xf32> -> vector<8x32xf32>
    %c0_9 = arith.constant 0 : index
    %c0_10 = arith.constant 0 : index
    %10 = vector.load %arg5[%c0_9, %c0_10] : memref<1x32xf32, #tpu.memory_space<vmem>>, vector<1x32xf32>
    %11 = vector.broadcast %10 : vector<1x32xf32> to vector<8x32xf32>
    %12 = arith.addf %9, %11 : vector<8x32xf32>
    %c0_11 = arith.constant 0 : index
    %c0_12 = arith.constant 0 : index
    %13 = vector.load %arg6[%c0_11, %c0_12] : memref<8x32xf32, #tpu.memory_space<vmem>>, vector<8x32xf32>
    tpu.vector_store %arg6[%c0_11, %c0_12], %12 {strides = array<i32>} : memref<8x32xf32, #tpu.memory_space<vmem>>, vector<8x32xf32>,
    return
  }
  func.func @transform_0(%arg0: i32) -> (i32, i32) {
    %c0_i32 = arith.constant 0 : i32
    %c0_i32_0 = arith.constant 0 : i32
    return %arg0, %c0_i32 : i32, i32
  }
  func.func @transform_1(%arg0: i32) -> (i32, i32) {
    %c0_i32 = arith.constant 0 : i32
    %c0_i32_0 = arith.constant 0 : i32
    %c0_i32_1 = arith.constant 0 : i32
    return %c0_i32, %c0_i32_0 : i32, i32
  }
  func.func @transform_2(%arg0: i32) -> (i32, i32) {
    %c0_i32 = arith.constant 0 : i32
    %c0_i32_0 = arith.constant 0 : i32
    %c0_i32_1 = arith.constant 0 : i32
    return %c0_i32, %c0_i32_0 : i32, i32
  }
  func.func @transform_3(%arg0: i32) -> (i32, i32) {
    %c0_i32 = arith.constant 0 : i32
    %c0_i32_0 = arith.constant 0 : i32
    %c0_i32_1 = arith.constant 0 : i32
    return %c0_i32, %c0_i32_0 : i32, i32
  }
  func.func @transform_4(%arg0: i32) -> (i32, i32) {
    %c0_i32 = arith.constant 0 : i32
    %c0_i32_0 = arith.constant 0 : i32
    %c0_i32_1 = arith.constant 0 : i32
    return %c0_i32, %c0_i32_0 : i32, i32
  }
  func.func @transform_5(%arg0: i32) -> (i32, i32) {
    %c0_i32 = arith.constant 0 : i32
    %c0_i32_0 = arith.constant 0 : i32
    return %arg0, %c0_i32 : i32, i32
  }
}

</mosaic_0001>

<llo_original>
// kernel: a_call__.1
$region0: #{a_call__.1}
  #allocation0 [shape = 'u32[]', space=smem, size = 0x4, offset = 0x4, fixed_abs, tag = 'smem constant byte address 0x4 - core index']
  #allocation1 [shape = 'u32[144,128]{1,0:T(1,128)}', space=vmem, size = 0x12000, scoped, tag = 'internal scratch']
  %s0 = inlined_call_operand.hbm [shape: f32[8,32], index: 0, kind: input, shape index: {}]
  %s1 = inlined_call_operand.hbm [shape: f32[32,64], index: 1, kind: input, shape index: {}]
  %s2 = inlined_call_operand.vmem [shape: f32[1,64], index: 2, kind: input, shape index: {}]
  %s3 = inlined_call_operand.hbm [shape: f32[64,32], index: 3, kind: input, shape index: {}]
  %s4 = inlined_call_operand.vmem [shape: f32[1,32], index: 4, kind: input, shape index: {}]
  %s5 = inlined_call_operand.hbm [shape: f32[8,32], index: 5, kind: output, shape index: {}]
  %s6 = sld [smem:[#allocation0]]
  $region42: #{a_call__.1} parent=0
    _
  %s8 = ssub.s32 1, %s6
  %s9 = scalar_select 0, %s8, %s6
  $region1: #{a_call__.1} parent=0
    #allocation2 [shape = 'u8[4096]{0}', space=vmem, size = 0x1000, scoped, tag = 'input window, operand 0, single buffered']
    #allocation3 [shape = 's32[1]{0}', space=sflag, size = 0x4, scoped, tag = 'scoped memory for a_call__.1']
    #allocation4 [shape = 's32[1]{0}', space=sflag, size = 0x4, scoped, tag = 'scoped memory for a_call__.1']
    #allocation5 [shape = 'u8[16384]{0}', space=vmem, size = 0x4000, scoped, tag = 'input window, operand 1, single buffered']
    #allocation6 [shape = 's32[1]{0}', space=sflag, size = 0x4, scoped, tag = 'scoped memory for a_call__.1']
    #allocation7 [shape = 'u8[32768]{0}', space=vmem, size = 0x8000, scoped, tag = 'input window, operand 3, single buffered']
    #allocation8 [shape = 'u8[4096]{0}', space=vmem, size = 0x1000, scoped, tag = 'output window, operand 0, single buffered']
    %10 = vsyncpa [#allocation3], 0
    %11 = vsyncpa [#allocation6], 0
    %12 = vsyncpa [#allocation4], 0
    // Predicated region
    $region2: #{a_call__.1} parent=1 // pred_check
      _
    $region3: #{a_call__.1} parent=1 // pred_check_branch
      %14 = sbr.rel (0) target = $region5
    $region4: #{a_call__.1} parent=1 // pred_region
      %s16 = ssub.s32 128, 128
      %17 = vsyncadd [#allocation3], %s16
      %s19 = sshll.u32 [#allocation2], 4
      %s20 = int_to_ptr.vmem [resolvable:$true] %s19
      %22 = dma.hbm_to_vmem [thread:$0]  %s0, 128, %s20, [#allocation3]
    $region5: #{a_call__.1} parent=1 // pred_fallthru
      _
    // Predicated region
    $region6: #{a_call__.1} parent=1 // pred_check
      _
    $region7: #{a_call__.1} parent=1 // pred_check_branch
      %24 = sbr.rel (0) target = $region9
    $region8: #{a_call__.1} parent=1 // pred_region
      %s26 = ssub.s32 512, 512
      %27 = vsyncadd [#allocation6], %s26
      %s28 = sshll.u32 [#allocation5], 4
      %s29 = int_to_ptr.vmem [resolvable:$true] %s28
      %34 = dma.hbm_to_vmem [thread:$0]  %s1, 512, %s29, [#allocation6], 128, 128, 8
    $region9: #{a_call__.1} parent=1 // pred_fallthru
      _
    // Predicated region
    $region10: #{a_call__.1} parent=1 // pred_check
      _
    $region11: #{a_call__.1} parent=1 // pred_check_branch
      %36 = sbr.rel (0) target = $region13
    $region12: #{a_call__.1} parent=1 // pred_region
      _
    $region13: #{a_call__.1} parent=1 // pred_fallthru
      _
    // Predicated region
    $region14: #{a_call__.1} parent=1 // pred_check
      _
    $region15: #{a_call__.1} parent=1 // pred_check_branch
      %38 = sbr.rel (0) target = $region17
    $region16: #{a_call__.1} parent=1 // pred_region
      %s40 = ssub.s32 1024, 1024
      %41 = vsyncadd [#allocation6], %s40
      %s42 = sshll.u32 [#allocation7], 4
      %s43 = int_to_ptr.vmem [resolvable:$true] %s42
      %48 = dma.hbm_to_vmem [thread:$0]  %s3, 1024, %s43, [#allocation6], 128, 128, 8
    $region17: #{a_call__.1} parent=1 // pred_fallthru
      _
    // Predicated region
    $region18: #{a_call__.1} parent=1 // pred_check
      _
    $region19: #{a_call__.1} parent=1 // pred_check_branch
      %50 = sbr.rel (0) target = $region21
    $region20: #{a_call__.1} parent=1 // pred_region
      _
    $region21: #{a_call__.1} parent=1 // pred_fallthru
      _
    // Predicated region
    $region22: #{a_call__.1} parent=1 // pred_check
      _
    $region23: #{a_call__.1} parent=1 // pred_check_branch
      %52 = sbr.rel (0) target = $region25
    $region24: #{a_call__.1} parent=1 // pred_region
      %53 = dma.done [#allocation3], 128
    $region25: #{a_call__.1} parent=1 // pred_fallthru
      _
    // Predicated region
    $region26: #{a_call__.1} parent=1 // pred_check
      _
    $region27: #{a_call__.1} parent=1 // pred_check_branch
      %55 = sbr.rel (0) target = $region29
    $region28: #{a_call__.1} parent=1 // pred_region
      %56 = dma.done [#allocation6], 512
    $region29: #{a_call__.1} parent=1 // pred_fallthru
      _
    // Predicated region
    $region30: #{a_call__.1} parent=1 // pred_check
      _
    $region31: #{a_call__.1} parent=1 // pred_check_branch
      %58 = sbr.rel (0) target = $region33
    $region32: #{a_call__.1} parent=1 // pred_region
      %59 = dma.done [#allocation6], 1024
    $region33: #{a_call__.1} parent=1 // pred_fallthru
      _
    %v60 = vld [vmem:[#allocation2] sm:$0xff]
    %v61 = vld [vmem:[#allocation5] sm:$0xff]
    %v62 = vld [vmem:[#allocation5 + $0x8] sm:$0xff]
    %v63 = vld [vmem:[#allocation5 + $0x10] sm:$0xff]
    %v64 = vld [vmem:[#allocation5 + $0x18] sm:$0xff]
    %v65 = vld [vmem:[%s2] sm:$0x1]
    %v67 = vlaneseq
    %v68 = vshrl.u32 %v67, 7
    %v69 = vsub.s32 0, %v68
    %v70 = vrot.slane %v65, %v69
    %vm72 = vcmask 261120
    %v74 = vsel %vm72, %v60, 0
    %76 = vmatprep.subr.mxu0 0.0
    %77 = vmatpush1.msra.mxu0 0.0
    %78 = vmatprep.subr.mxu0 0.0
    %79 = vmatpush1.msra.mxu0 0.0
    %80 = vmatprep.subr.mxu0 0.0
    %81 = vmatpush1.msra.mxu0 0.0
    %82 = vmatprep.subr.mxu0 0.0
    %83 = vmatpush1.msra.mxu0 0.0
    %84 = vmatprep.subr.mxu0 0.0
    %85 = vmatpush1.msra.mxu0 0.0
    %86 = vmatprep.subr.mxu0 0.0
    %87 = vmatpush1.msra.mxu0 0.0
    %88 = vmatprep.subr.mxu0 0.0
    %89 = vmatpush1.msra.mxu0 0.0
    %90 = vmatprep.subr.mxu0 0.0
    %91 = vmatpush1.msra.mxu0 0.0
    %92 = vmatprep.subr.mxu0 0.0
    %93 = vmatpush1.msra.mxu0 0.0
    %94 = vmatprep.subr.mxu0 0.0
    %95 = vmatpush1.msra.mxu0 0.0
    %96 = vmatprep.subr.mxu0 0.0
    %97 = vmatpush1.msra.mxu0 0.0
    %98 = vmatprep.subr.mxu0 0.0
    %99 = vmatpush1.msra.mxu0 0.0
    %100 = vmatprep.subr.mxu0 0.0
    %101 = vmatpush1.msra.mxu0 %v64
    %102 = vmatprep.subr.mxu0 0.0
    %103 = vmatpush1.msra.mxu0 %v63
    %104 = vmatprep.subr.mxu0 0.0
    %105 = vmatpush1.msra.mxu0 %v62
    %106 = vmatprep.subr.mxu0 0.0
    %107 = vmatpush1.msra.mxu0 %v61
    %108 = vmatprep.subr.mxu0 0.0
    %109 = vmatpush2.msra.mxu0 0.0
    %110 = vmatprep.subr.mxu0 0.0
    %111 = vmatpush2.msra.mxu0 0.0
    %112 = vmatprep.subr.mxu0 0.0
    %113 = vmatpush2.msra.mxu0 0.0
    %114 = vmatprep.subr.mxu0 0.0
    %115 = vmatpush2.msra.mxu0 0.0
    %116 = vmatprep.subr.mxu0 0.0
    %117 = vmatpush2.msra.mxu0 0.0
    %118 = vmatprep.subr.mxu0 0.0
    %119 = vmatpush2.msra.mxu0 0.0
    %120 = vmatprep.subr.mxu0 0.0
    %121 = vmatpush2.msra.mxu0 0.0
    %122 = vmatprep.subr.mxu0 0.0
    %123 = vmatpush2.msra.mxu0 0.0
    %124 = vmatprep.subr.mxu0 0.0
    %125 = vmatpush2.msra.mxu0 0.0
    %126 = vmatprep.subr.mxu0 0.0
    %127 = vmatpush2.msra.mxu0 0.0
    %128 = vmatprep.subr.mxu0 0.0
    %129 = vmatpush2.msra.mxu0 0.0
    %130 = vmatprep.subr.mxu0 0.0
    %131 = vmatpush2.msra.mxu0 0.0
    %132 = vmatprep.subr.mxu0 0.0
    %133 = vmatpush2.msra.mxu0 0.0
    %134 = vmatprep.subr.mxu0 0.0
    %135 = vmatpush2.msra.mxu0 0.0
    %136 = vmatprep.subr.mxu0 0.0
    %137 = vmatpush2.msra.mxu0 0.0
    %138 = vmatprep.subr.mxu0 0.0
    %139 = vmatpush2.msra.mxu0 0.0
    %140 = vmatprep.mubr.f32.mxu0 0.0
    %141 = vmatmul.mubr.f32.gmra.mxu0 %v74
    %v142 = vpop.f32.mrf.mxu0
    %v143 = vadd.f32 %v70, %v142
    %v144 = vpop.f32.mrf.mxu0
    %145 = vdwg.mxu0
    %v146 = vmax.f32 %v143, 0.0
    %v147 = vld [vmem:[#allocation7] sm:$0xff]
    %v148 = vld [vmem:[#allocation7 + $0x8] sm:$0xff]
    %v149 = vld [vmem:[#allocation7 + $0x10] sm:$0xff]
    %v150 = vld [vmem:[#allocation7 + $0x18] sm:$0xff]
    %v151 = vld [vmem:[#allocation7 + $0x20] sm:$0xff]
    %v152 = vld [vmem:[#allocation7 + $0x28] sm:$0xff]
    %v153 = vld [vmem:[#allocation7 + $0x30] sm:$0xff]
    %v154 = vld [vmem:[#allocation7 + $0x38] sm:$0xff]
    %v155 = vld [vmem:[%s4] sm:$0x1]
    %v157 = vlaneseq
    %v158 = vshrl.u32 %v157, 7
    %v159 = vsub.s32 0, %v158
    %v160 = vrot.slane %v155, %v159
    %vm162 = vcmask 523264
    %v164 = vsel %vm162, %v146, 0
    %166 = vmatprep.subr.mxu0 0.0
    %167 = vmatpush1.msra.mxu0 0.0
    %168 = vmatprep.subr.mxu0 0.0
    %169 = vmatpush1.msra.mxu0 0.0
    %170 = vmatprep.subr.mxu0 0.0
    %171 = vmatpush1.msra.mxu0 0.0
    %172 = vmatprep.subr.mxu0 0.0
    %173 = vmatpush1.msra.mxu0 0.0
    %174 = vmatprep.subr.mxu0 0.0
    %175 = vmatpush1.msra.mxu0 0.0
    %176 = vmatprep.subr.mxu0 0.0
    %177 = vmatpush1.msra.mxu0 0.0
    %178 = vmatprep.subr.mxu0 0.0
    %179 = vmatpush1.msra.mxu0 0.0
    %180 = vmatprep.subr.mxu0 0.0
    %181 = vmatpush1.msra.mxu0 0.0
    %182 = vmatprep.subr.mxu0 0.0
    %183 = vmatpush1.msra.mxu0 %v154
    %184 = vmatprep.subr.mxu0 0.0
    %185 = vmatpush1.msra.mxu0 %v153
    %186 = vmatprep.subr.mxu0 0.0
    %187 = vmatpush1.msra.mxu0 %v152
    %188 = vmatprep.subr.mxu0 0.0
    %189 = vmatpush1.msra.mxu0 %v151
    %190 = vmatprep.subr.mxu0 0.0
    %191 = vmatpush1.msra.mxu0 %v150
    %192 = vmatprep.subr.mxu0 0.0
    %193 = vmatpush1.msra.mxu0 %v149
    %194 = vmatprep.subr.mxu0 0.0
    %195 = vmatpush1.msra.mxu0 %v148
    %196 = vmatprep.subr.mxu0 0.0
    %197 = vmatpush1.msra.mxu0 %v147
    %198 = vmatprep.subr.mxu0 0.0
    %199 = vmatpush2.msra.mxu0 0.0
    %200 = vmatprep.subr.mxu0 0.0
    %201 = vmatpush2.msra.mxu0 0.0
    %202 = vmatprep.subr.mxu0 0.0
    %203 = vmatpush2.msra.mxu0 0.0
    %204 = vmatprep.subr.mxu0 0.0
    %205 = vmatpush2.msra.mxu0 0.0
    %206 = vmatprep.subr.mxu0 0.0
    %207 = vmatpush2.msra.mxu0 0.0
    %208 = vmatprep.subr.mxu0 0.0
    %209 = vmatpush2.msra.mxu0 0.0
    %210 = vmatprep.subr.mxu0 0.0
    %211 = vmatpush2.msra.mxu0 0.0
    %212 = vmatprep.subr.mxu0 0.0
    %213 = vmatpush2.msra.mxu0 0.0
    %214 = vmatprep.subr.mxu0 0.0
    %215 = vmatpush2.msra.mxu0 0.0
    %216 = vmatprep.subr.mxu0 0.0
    %217 = vmatpush2.msra.mxu0 0.0
    %218 = vmatprep.subr.mxu0 0.0
    %219 = vmatpush2.msra.mxu0 0.0
    %220 = vmatprep.subr.mxu0 0.0
    %221 = vmatpush2.msra.mxu0 0.0
    %222 = vmatprep.subr.mxu0 0.0
    %223 = vmatpush2.msra.mxu0 0.0
    %224 = vmatprep.subr.mxu0 0.0
    %225 = vmatpush2.msra.mxu0 0.0
    %226 = vmatprep.subr.mxu0 0.0
    %227 = vmatpush2.msra.mxu0 0.0
    %228 = vmatprep.subr.mxu0 0.0
    %229 = vmatpush2.msra.mxu0 0.0
    %230 = vmatprep.mubr.f32.mxu0 0.0
    %231 = vmatmul.mubr.f32.gmra.mxu0 %v164
    %v232 = vpop.f32.mrf.mxu0
    %v233 = vadd.f32 %v160, %v232
    %v234 = vpop.f32.mrf.mxu0
    %235 = vdwg.mxu0
    %236 = vst.msk [vmem:[#allocation8] sm:$0xff] %vm72, %v233
    // Predicated region
    $region34: #{a_call__.1} parent=1 // pred_check
      _
    $region35: #{a_call__.1} parent=1 // pred_check_branch
      %238 = sbr.rel (0) target = $region37
    $region36: #{a_call__.1} parent=1 // pred_region
      %s240 = ssub.s32 128, 128
      %241 = vsyncadd [#allocation4], %s240
      %s243 = sshll.u32 [#allocation8], 4
      %s244 = int_to_ptr.vmem [resolvable:$true] %s243
      %246 = dma.vmem_to_hbm [thread:$0]  %s244, 128, %s5, [#allocation4]
    $region37: #{a_call__.1} parent=1 // pred_fallthru
      _
    // Predicated region
    $region38: #{a_call__.1} parent=1 // pred_check
      _
    $region39: #{a_call__.1} parent=1 // pred_check_branch
      %248 = sbr.rel (0) target = $region41
    $region40: #{a_call__.1} parent=1 // pred_region
      %249 = dma.done [#allocation4], 128
    $region41: #{a_call__.1} parent=1 // pred_fallthru
      _
    %250 = vsyncpa [#allocation3], 1
    %251 = vsyncpa [#allocation6], 1
    %252 = vsyncpa [#allocation4], 1

</llo_original>
